<compile_context>
chip_gen: v6e
topology: v6e:2x2x1
jax: 0.10.0
libtpu: 0.0.40
codegen_flags: <defaults>
</compile_context>

<pallas_src>
import jax
import jax.numpy as jnp
from jax.experimental import pallas as pl
from jax.experimental.pallas import tpu as pltpu

_LANE = 128
_SUBLANE = 8


def _rup(x, m):
    return ((x + m - 1) // m) * m


def _rdown(x, m):
    return (x // m) * m


def _vmem_capacity_bytes():
    """Physical per-core VMEM, with a conservative fallback (v7x = 64 MiB)."""
    try:
        cap = getattr(pltpu.get_tpu_info(), "vmem_capacity_bytes", None)
        if cap:
            return int(cap)
    except Exception:
        pass
    return 64 * 1024 * 1024


def _choose_tiles(rows, hw, itemsize, hbm_block_bytes, vmem_block_bytes):
    """Pick (tile_r, tile_hw) for the (rows, hw) view.

    Invariants:
      * tile_hw is a multiple of 128, or equals hw (legal lane dim).
      * tile_r is a multiple of 128 or equals rows when tile_hw == hw (so the
        lane-dense (2, tile_r) output block is legal); a multiple of 8 or equals
        rows otherwise.
    """
    hw_pad = _rup(hw, _LANE)
    # Rows per full-HW block: bounded by the HBM chunk target (actual bytes moved)
    # and by the padded VMEM footprint (lanes pad to 128 when hw doesn't).
    rows_per_block = int(min(hbm_block_bytes // max(hw * itemsize, 1),
                             vmem_block_bytes // (hw_pad * itemsize)))

    if rows <= rows_per_block:
        if rows >= 256:
            # Everything fits one block, but split in two so the "parallel" row
            # axis feeds both TensorCores on v7x (harmless on 1-TC chips).
            return _rup(-(-rows // 2), _LANE), hw
        return rows, hw

    if rows_per_block >= _LANE:
        # Full-HW row tiles: contiguous HBM reads, one reduction step per tile.
        return _rdown(rows_per_block, _LANE), hw

    # hw is huge relative to the block budget: split the reduction (HW) axis.
    tile_r = rows if rows < _LANE else _LANE
    budget_hw = max(int(hbm_block_bytes // (max(tile_r, 1) * itemsize)), _LANE)
    tile_hw = max(min(_rdown(budget_hw, _LANE), _rdown(hw, _LANE)), _LANE)
    return tile_r, tile_hw


def _make_single_pass_kernel(inv_hw):
    """num_hw == 1: whole HW extent per row tile; no scratch, no mask."""

    def kernel(x_ref, o_ref):
        x = x_ref[...]                                   # (tile_r, hw), native dtype
        mx = jnp.max(x, axis=-1)                         # max is exact in any dtype
        sm = jnp.sum(x.astype(jnp.float32), axis=-1)     # f32 accumulation for mean
        # Single sublane->lane relayout per row tile (inherent to the lane-dense
        # (2, rows) output); hidden under this tile's multi-microsecond DMA.
        o_ref[0:1, :] = mx[None, :].astype(o_ref.dtype)
        o_ref[1:2, :] = (sm * inv_hw)[None, :].astype(o_ref.dtype)

    return kernel


def _make_multi_step_kernel(tile_r, tile_hw, hw_total, needs_mask, inv_hw):
    """num_hw > 1: running max/sum in sublane-major (tile_r, 1) f32 scratch."""

    def kernel(x_ref, o_ref, max_acc, sum_acc):
        k = pl.program_id(1)                 # HW (reduction) axis, last in grid
        last = pl.num_programs(1) - 1

        @pl.when(k == 0)
        def _init():
            max_acc[...] = jnp.full((tile_r, 1), -jnp.inf, dtype=jnp.float32)
            sum_acc[...] = jnp.zeros((tile_r, 1), dtype=jnp.float32)

        def accumulate(x_for_max, x_for_sum_f32):
            # (tile_r, 1) accumulators: reduce results stay sublane-major, so no
            # per-step sublane->lane relayout is needed.
            max_acc[...] = jnp.maximum(
                max_acc[...],
                jnp.max(x_for_max, axis=-1, keepdims=True).astype(jnp.float32))
            sum_acc[...] = sum_acc[...] + jnp.sum(
                x_for_sum_f32, axis=-1, keepdims=True)

        x = x_ref[...]                                   # (tile_r, tile_hw)
        if needs_mask:
            # Tail mask only on the final reduction step; hot path stays unmasked.
            @pl.when(k != last)
            def _hot():
                accumulate(x, x.astype(jnp.float32))

            @pl.when(k == last)
            def _tail():
                col = jax.lax.broadcasted_iota(jnp.int32, (1, tile_hw), 1)
                valid = col < (hw_total - k * tile_hw)
                xf = x.astype(jnp.float32)
                accumulate(jnp.where(valid, xf, -jnp.inf),
                           jnp.where(valid, xf, 0.0))
        else:
            accumulate(x, x.astype(jnp.float32))

        @pl.when(k == last)
        def _finalize():
            # Output is (rows, 2) sublane-major: no relayout, tiny writeback.
            o_ref[:, 0:1] = max_acc[...].astype(o_ref.dtype)
            o_ref[:, 1:2] = (sum_acc[...] * inv_hw).astype(o_ref.dtype)

    return kernel


def adaptive_concat_pool2d(x, *, target_block_bytes=8 * 1024 * 1024,
                           max_block_vmem_bytes=12 * 1024 * 1024):
    """x: (N, C, H, W) -> (N, 2*C, 1, 1), matching AdaptiveConcatPool2d(output_size=1)."""
    assert x.ndim == 4, x.shape
    assert jnp.issubdtype(x.dtype, jnp.floating), "floating dtypes only"
    N, C, H, W = x.shape
    rows, hw = N * C, H * W
    itemsize = jnp.dtype(x.dtype).itemsize
    inv_hw = 1.0 / float(hw)

    # For sub-4-byte dtypes shrink the per-buffer VMEM budget so the widened f32
    # sum temporaries the compiler may materialize still fit comfortably.
    vmem_block_bytes = max(max_block_vmem_bytes * itemsize // 4, 1 << 20)
    tile_r, tile_hw = _choose_tiles(rows, hw, itemsize,
                                    target_block_bytes, vmem_block_bytes)
    num_r = -(-rows // tile_r)
    num_hw = -(-hw // tile_hw)

    # Contiguous collapse (no data movement): rows on sublanes, HW on lanes.
    x2 = x.reshape(rows, hw)
    vmem_cap = _vmem_capacity_bytes()

    if num_hw == 1:
        # ---- Single-pass path: one reduction step per row tile. ----
        in_vmem = _rup(tile_r, _SUBLANE) * _rup(hw, _LANE) * itemsize
        out_vmem = _SUBLANE * _rup(tile_r, _LANE) * itemsize
        need = 2 * in_vmem + 2 * out_vmem + (2 << 20)
        if itemsize < 4:
            need += (in_vmem // itemsize) * 4      # widened f32 temp headroom
        vmem_limit = int(min(max(need, 8 << 20), (vmem_cap * 3) // 4))

        out = pl.pallas_call(
            _make_single_pass_kernel(inv_hw),
            out_shape=jax.ShapeDtypeStruct((2, rows), x.dtype),
            grid=(num_r,),
            in_specs=[pl.BlockSpec((tile_r, hw), lambda i: (i, 0))],
            out_specs=pl.BlockSpec((2, tile_r), lambda i: (0, i)),
            compiler_params=pltpu.CompilerParams(
                dimension_semantics=("parallel",),
                vmem_limit_bytes=vmem_limit,
            ),
        )(x2)
        mx = out[0, :].reshape(N, C)
        av = out[1, :].reshape(N, C)
    else:
        # ---- Split-reduction path: hw too large for one block per row tile. ----
        needs_mask = (hw % tile_hw) != 0
        in_vmem = _rup(tile_r, _SUBLANE) * tile_hw * itemsize
        out_vmem = _rup(tile_r, _SUBLANE) * _LANE * itemsize
        scratch_vmem = 2 * _rup(tile_r, _SUBLANE) * _LANE * 4
        need = 2 * in_vmem + 2 * out_vmem + scratch_vmem + (2 << 20)
        if itemsize < 4:
            need += (in_vmem // itemsize) * 4
        vmem_limit = int(min(max(need, 8 << 20), (vmem_cap * 3) // 4))

        out = pl.pallas_call(
            _make_multi_step_kernel(tile_r, tile_hw, hw, needs_mask, inv_hw),
            out_shape=jax.ShapeDtypeStruct((rows, 2), x.dtype),
            grid=(num_r, num_hw),
            in_specs=[pl.BlockSpec((tile_r, tile_hw), lambda i, k: (i, k))],
            out_specs=pl.BlockSpec((tile_r, 2), lambda i, k: (i, 0)),
            scratch_shapes=[
                pltpu.VMEM((tile_r, 1), jnp.float32),   # running max
                pltpu.VMEM((tile_r, 1), jnp.float32),   # running sum
            ],
            compiler_params=pltpu.CompilerParams(
                dimension_semantics=("parallel", "arbitrary"),
                vmem_limit_bytes=vmem_limit,
            ),
        )(x2)
        mx = out[:, 0].reshape(N, C)
        av = out[:, 1].reshape(N, C)

    # Tiny epilogue: max channels first, then avg, plus the 1x1 spatial dims.
    # NOTE: row-tail tiles rely on Pallas boundary-block semantics — padded rows
    # are reduced (possibly garbage) and dropped by the masked writeback; this is
    # correct because the reduction is strictly per-row.
    return jnp.concatenate([mx, av], axis=1).reshape(N, 2 * C, 1, 1)


if __name__ == "__main__":
    def _reference(x):
        ref_max = jnp.max(x, axis=(2, 3), keepdims=True)    # (N, C, 1, 1)
        ref_avg = jnp.mean(x, axis=(2, 3), keepdims=True)   # (N, C, 1, 1)
        return jnp.concatenate([ref_max, ref_avg], axis=1)  # (N, 2C, 1, 1)

    key = jax.random.PRNGKey(0)

    # Main check: small shape consistent with the classifier-head use.
    N, C, H, W = 2, 4, 16, 16
    x = jax.random.normal(key, (N, C, H, W), dtype=jnp.float32)
    y = jax.block_until_ready(adaptive_concat_pool2d(x))
    assert y.shape == (N, 2 * C, 1, 1), y.shape
    assert jnp.allclose(y, _reference(x), atol=1e-5, rtol=1e-5), "mismatch (single-pass)"

    # Non-power-of-two rows / hw (still the single-pass path).
    xb = jax.random.normal(jax.random.PRNGKey(0), (2, 3, 7, 7), dtype=jnp.float32)
    yb = jax.block_until_ready(adaptive_concat_pool2d(xb))
    assert yb.shape == (2, 6, 1, 1), yb.shape
    assert jnp.allclose(yb, _reference(xb), atol=1e-5, rtol=1e-5), "mismatch (odd shape)"

    # Force the split-reduction path (+ HW tail mask) with a tiny block budget.
    xc = jax.random.normal(jax.random.PRNGKey(0), (2, 3, 15, 15), dtype=jnp.float32)
    yc = jax.block_until_ready(
        adaptive_concat_pool2d(xc, target_block_bytes=4096, max_block_vmem_bytes=4096))
    assert yc.shape == (2, 6, 1, 1), yc.shape
    assert jnp.allclose(yc, _reference(xc), atol=1e-5, rtol=1e-5), "mismatch (split path)"

    print("KERNEL_OK")
</pallas_src>

<mosaic_0001>
module attributes {stable_mosaic.version = 11 : i64} {
  func.func @kernel(%arg0: i32, %arg1: memref<8x256xf32, #tpu.memory_space<vmem>>, %arg2: memref<2x8xf32, #tpu.memory_space<vmem>>) attributes {dimension_semantics = [#tpu.dimension_semantics<parallel>], iteration_bounds = array<i64: 1>, scalar_prefetch = 0 : i64, scratch_operands = 0 : i64, tpu.core_type = #tpu.core_type<tc>, window_params = [{transform_indices = @transform_0, window_bounds = array<i64: 8, 256>}, {transform_indices = @transform_1, window_bounds = array<i64: 2, 8>}]} {
    %c0 = arith.constant 0 : index
    %c0_0 = arith.constant 0 : index
    %0 = vector.load %arg1[%c0, %c0_0] : memref<8x256xf32, #tpu.memory_space<vmem>>, vector<8x256xf32>
    %cst = arith.constant dense<0xFF800000> : vector<8xf32>
    %1 = vector.multi_reduction <maximumf>, %0, %cst [1] : vector<8x256xf32> to vector<8xf32>
    %cst_1 = arith.constant dense<0.000000e+00> : vector<8xf32>
    %2 = vector.multi_reduction <add>, %0, %cst_1 [1] : vector<8x256xf32> to vector<8xf32>
    %3 = vector.shape_cast %1 : vector<8xf32> to vector<1x8xf32>
    %c0_2 = arith.constant 0 : index
    %c0_3 = arith.constant 0 : index
    %4 = vector.load %arg2[%c0_2, %c0_3] : memref<2x8xf32, #tpu.memory_space<vmem>>, vector<1x8xf32>
    tpu.vector_store %arg2[%c0_2, %c0_3], %3 {strides = array<i32>} : memref<2x8xf32, #tpu.memory_space<vmem>>, vector<1x8xf32>,
    %cst_4 = arith.constant 3.906250e-03 : f32
    %5 = vector.broadcast %cst_4 : f32 to vector<8xf32>
    %6 = arith.mulf %2, %5 : vector<8xf32>
    %7 = vector.shape_cast %6 : vector<8xf32> to vector<1x8xf32>
    %c1 = arith.constant 1 : index
    %c0_5 = arith.constant 0 : index
    %8 = vector.load %arg2[%c1, %c0_5] : memref<2x8xf32, #tpu.memory_space<vmem>>, vector<1x8xf32>
    tpu.vector_store %arg2[%c1, %c0_5], %7 {strides = array<i32>} : memref<2x8xf32, #tpu.memory_space<vmem>>, vector<1x8xf32>,
    return
  }
  func.func @transform_0(%arg0: i32) -> (i32, i32) {
    %c0_i32 = arith.constant 0 : i32
    %c0_i32_0 = arith.constant 0 : i32
    return %arg0, %c0_i32 : i32, i32
  }
  func.func @transform_1(%arg0: i32) -> (i32, i32) {
    %c0_i32 = arith.constant 0 : i32
    %c0_i32_0 = arith.constant 0 : i32
    return %c0_i32, %arg0 : i32, i32
  }
}

</mosaic_0001>

<llo_original>
// kernel: tpu_custom_call.1
$region0: #{tpu_custom_call.1}
  #allocation0 [shape = 'u32[]', space=smem, size = 0x4, offset = 0x4, fixed_abs, tag = 'smem constant byte address 0x4 - core index']
  #allocation1 [shape = 'u32[144,128]{1,0:T(1,128)}', space=vmem, size = 0x12000, scoped, tag = 'internal scratch']
  %s0 = inlined_call_operand.hbm [shape: f32[8,256], index: 0, kind: input, shape index: {}]
  %s1 = inlined_call_operand.hbm [shape: f32[2,8], index: 1, kind: output, shape index: {}]
  %s2 = sld [smem:[#allocation0]]
  $region18: #{tpu_custom_call.1} parent=0
    _
  %s4 = ssub.s32 1, %s2
  %s5 = scalar_select 0, %s4, %s2
  $region1: #{tpu_custom_call.1} parent=0
    #allocation2 [shape = 'u8[8192]{0}', space=vmem, size = 0x2000, scoped, tag = 'input window, operand 0, single buffered']
    #allocation3 [shape = 's32[1]{0}', space=sflag, size = 0x4, scoped, tag = 'scoped memory for tpu_custom_call.1']
    #allocation4 [shape = 's32[1]{0}', space=sflag, size = 0x4, scoped, tag = 'scoped memory for tpu_custom_call.1']
    #allocation5 [shape = 'u8[1024]{0}', space=vmem, size = 0x400, scoped, tag = 'output window, operand 0, single buffered']
    %6 = vsyncpa [#allocation3], 0
    %7 = vsyncpa [#allocation4], 0
    // Predicated region
    $region2: #{tpu_custom_call.1} parent=1 // pred_check
      _
    $region3: #{tpu_custom_call.1} parent=1 // pred_check_branch
      %9 = sbr.rel (0) target = $region5
    $region4: #{tpu_custom_call.1} parent=1 // pred_region
      %s11 = ssub.s32 256, 256
      %12 = vsyncadd [#allocation3], %s11
      %s14 = sshll.u32 [#allocation2], 4
      %s15 = int_to_ptr.vmem [resolvable:$true] %s14
      %17 = dma.hbm_to_vmem [thread:$0]  %s0, 256, %s15, [#allocation3]
    $region5: #{tpu_custom_call.1} parent=1 // pred_fallthru
      _
    // Predicated region
    $region6: #{tpu_custom_call.1} parent=1 // pred_check
      _
    $region7: #{tpu_custom_call.1} parent=1 // pred_check_branch
      %19 = sbr.rel (0) target = $region9
    $region8: #{tpu_custom_call.1} parent=1 // pred_region
      %20 = dma.done [#allocation3], 256
    $region9: #{tpu_custom_call.1} parent=1 // pred_fallthru
      _
    %v21 = vld [vmem:[#allocation2] sm:$0xff]
    %v22 = vld [vmem:[#allocation2 + $0x8] sm:$0xff]
    %v23 = vmax.f32 %v21, %v22
    %24 = vmax.xlane.f32.xlu0 %v23
    %v25 = vpop.xlane.xlu0 %24
    %v26 = vadd.f32 %v21, %v22
    %27 = vadd.xlane.f32.xlu0 %v26
    %v28 = vpop.xlane.xlu0 %27
    %v30 = vlaneseq
    %v31 = vand.u32 %v30, 127
    %v32 = vlaneseq
    %v33 = vshrl.u32 %v32, 7
    %v34 = vsub.s32 %v31, %v33
    %v35 = vrot.slane %v25, %v34
    %vm37 = vcmask 57344
    %38 = vst.msk [vmem:[#allocation5] sm:$0x1] %vm37, %v35
    %v39 = vmul.f32 %v28, 0.00390625
    %v41 = vlaneseq
    %v42 = vshrl.u32 %v41, 7
    %v43 = vsub.s32 %v31, %v42
    %v44 = vrot.slane %v39, %v43
    %46 = vst.msk [vmem:[#allocation5 + $0x1] sm:$0x1] %vm37, %v44
    // Predicated region
    $region10: #{tpu_custom_call.1} parent=1 // pred_check
      _
    $region11: #{tpu_custom_call.1} parent=1 // pred_check_branch
      %48 = sbr.rel (0) target = $region13
    $region12: #{tpu_custom_call.1} parent=1 // pred_region
      %s50 = ssub.s32 32, 32
      %51 = vsyncadd [#allocation4], %s50
      %s53 = sshll.u32 [#allocation5], 4
      %s54 = int_to_ptr.vmem [resolvable:$true] %s53
      %56 = dma.vmem_to_hbm [thread:$0]  %s54, 32, %s1, [#allocation4]
    $region13: #{tpu_custom_call.1} parent=1 // pred_fallthru
      _
    // Predicated region
    $region14: #{tpu_custom_call.1} parent=1 // pred_check
      _
    $region15: #{tpu_custom_call.1} parent=1 // pred_check_branch
      %58 = sbr.rel (0) target = $region17
    $region16: #{tpu_custom_call.1} parent=1 // pred_region
      %59 = dma.done [#allocation4], 32
    $region17: #{tpu_custom_call.1} parent=1 // pred_fallthru
      _
    %60 = vsyncpa [#allocation3], 1
    %61 = vsyncpa [#allocation4], 1

</llo_original>
